<compile_context>
chip_gen: v5e
topology: v5e:2x2
jax: 0.10.0
libtpu: 0.0.40
codegen_flags: <defaults>
</compile_context>

<pallas_src>
import functools

import jax
import jax.numpy as jnp
import numpy as np
from jax.experimental import pallas as pl
from jax.experimental.pallas import tpu as pltpu


def _upsample_conv_kernel(x_ref, m_ref, b_ref, o_ref):
    """One batch element of fused nearest-upsample-2x + 3x3 conv.

    x_ref : (1, H+2, C*W)      zero-padded (1 row top/bottom) image, lane-dense (VMEM)
    m_ref : (3, C*W, 2*C*2W)   folded weights per original-row offset s (VMEM)
    b_ref : (1, 2*C*2W)        bias broadcast over the [phase, co, col] lane axis (VMEM)
    o_ref : (1, H, 2*C*2W)     output slab: row i, lane a*(C*2W)+co*2W+m = y[co, 2i+a, m]
    """
    tP = o_ref.shape[1]
    acc = jnp.dot(x_ref[0, 0:tP, :], m_ref[0], preferred_element_type=jnp.float32)
    acc = acc + jnp.dot(x_ref[0, 1:tP + 1, :], m_ref[1],
                        preferred_element_type=jnp.float32)
    acc = acc + jnp.dot(x_ref[0, 2:tP + 2, :], m_ref[2],
                        preferred_element_type=jnp.float32)
    o_ref[0, :, :] = (acc + b_ref[...]).astype(o_ref.dtype)


def _build_folded_weights(w, C, W):
    """Fold nearest-upsample-2x + 3x3 conv into M3[s] (s = row offset i-1/i/i+1).

    M3[s][ci*W + q, a*(C*2W) + co*2W + m] is the coefficient of original pixel
    x[ci, i-1+s, q] in output y[co, 2i+a, m].
    """
    # Row-offset selector: output row phase a, tap kh reads original row i-1+s.
    A = np.zeros((2, 3, 3), dtype=np.float32)          # [a, kh, s]
    for a in range(2):
        for kh in range(3):
            s = 1 + (a + kh - 1) // 2
            A[a, kh, s] = 1.0
    # Width fold: output col m, tap kw reads original col (m+kw-1)//2 (zero if padded).
    Gk = np.zeros((3, W, 2 * W), dtype=np.float32)     # [kw, q, m]
    for kw in range(3):
        for m in range(2 * W):
            t = m + kw
            if 1 <= t <= 2 * W:
                Gk[kw, (t - 1) // 2, m] = 1.0
    # M3[s, ci, q, a, co, m] = sum_{kh,kw} A[a,kh,s] * w[co,ci,kh,kw] * Gk[kw,q,m]
    m3 = jnp.einsum('ahs,oihv,vqm->siqaom', A, w, Gk)
    return m3.reshape(3, C * W, 2 * C * 2 * W)


@functools.partial(jax.jit, static_argnames=("use_conv",))
def upsample_forward(x, w, b, use_conv=True):
    """Forward pass of Upsample(channels, use_conv, dims=2).

    x: (N, C, H, W) float32 (NCHW);  w: (C, C, 3, 3) OIHW;  b: (C,)
    returns (N, C, 2H, 2W) float32.
    """
    N, C, H, W = x.shape

    if not use_conv:
        # F.interpolate(scale_factor=2, mode='nearest'): pure re-indexing glue.
        return jnp.repeat(jnp.repeat(x, 2, axis=2), 2, axis=3)

    assert w.shape == (C, C, 3, 3)
    x = x.astype(jnp.float32)
    w = w.astype(jnp.float32)
    b = b.astype(jnp.float32)

    lane_in = C * W                 # input lanes
    lane_out = 2 * C * 2 * W        # [row-phase a, co, output col] lanes

    # Folded weights, bias row (layout-matched to the output lane axis).
    m3 = _build_folded_weights(w, C, W)                                  # (3, CW, 4CW)
    bias_row = jnp.tile(jnp.repeat(b, 2 * W), 2).reshape(1, lane_out)    # (1, 4CW)

    # Lane-dense input slab: (N, H, C*W), zero halo rows baked in -> (N, H+2, C*W).
    x_lane = x.transpose(0, 2, 1, 3).reshape(N, H, lane_in)
    x_lane = jnp.pad(x_lane, ((0, 0), (1, 1), (0, 0)))

    # Actual double-buffered VMEM footprint (bytes) + headroom.
    buf_elems = (2 * (H + 2) * lane_in      # x_lane block
                 + 2 * 3 * lane_in * lane_out   # m3
                 + 2 * lane_out                 # bias
                 + 2 * H * lane_out)            # output block
    vmem_limit = max(4 * buf_elems * 4, 4 << 20)

    out_k = pl.pallas_call(
        _upsample_conv_kernel,
        out_shape=jax.ShapeDtypeStruct((N, H, lane_out), x.dtype),
        grid_spec=pltpu.PrefetchScalarGridSpec(
            num_scalar_prefetch=0,
            grid=(N,),
            in_specs=[
                pl.BlockSpec((1, H + 2, lane_in), lambda n: (n, 0, 0)),
                pl.BlockSpec((3, lane_in, lane_out), lambda n: (0, 0, 0)),
                pl.BlockSpec((1, lane_out), lambda n: (0, 0)),
            ],
            out_specs=pl.BlockSpec((1, H, lane_out), lambda n: (n, 0, 0)),
        ),
        compiler_params=pltpu.CompilerParams(
            dimension_semantics=("parallel",),
            vmem_limit_bytes=int(vmem_limit),
        ),
    )(x_lane, m3, bias_row)

    # Layout plumbing back to NCHW: (N, H, [a, co, m]) -> (N, C, 2H, 2W).
    out = (out_k.reshape(N, H, 2, C, 2 * W)
                 .transpose(0, 3, 1, 2, 4)
                 .reshape(N, C, 2 * H, 2 * W))
    return out


if __name__ == "__main__":
    # Small shapes consistent with the module: batch=2, channels=4, spatial=16.
    N, C, H, W = 2, 4, 16, 16
    key = jax.random.PRNGKey(0)
    kx, kw_, kb = jax.random.split(key, 3)

    x = jax.random.normal(kx, (N, C, H, W), dtype=jnp.float32)
    # PyTorch Conv2d weight layout (OIHW); exact init distribution is irrelevant.
    w = jax.random.normal(kw_, (C, C, 3, 3), dtype=jnp.float32) * 0.1
    b = jax.random.normal(kb, (C,), dtype=jnp.float32) * 0.1

    out = jax.block_until_ready(upsample_forward(x, w, b, use_conv=True))
    assert out.shape == (N, C, 2 * H, 2 * W)

    # use_conv=False path (pure nearest upsample).
    out_nc = jax.block_until_ready(upsample_forward(x, w, b, use_conv=False))
    assert out_nc.shape == (N, C, 2 * H, 2 * W)

    # Reference: pure-JAX nearest upsample + conv (NCHW / OIHW).
    x_up = jnp.repeat(jnp.repeat(x, 2, axis=2), 2, axis=3)
    ref = jax.lax.conv_general_dilated(
        x_up, w, window_strides=(1, 1), padding=((1, 1), (1, 1)),
        dimension_numbers=("NCHW", "OIHW", "NCHW"),
    ) + b.reshape(1, C, 1, 1)
    ref = jax.block_until_ready(ref)

    err = jnp.max(jnp.abs(out - ref))
    assert jnp.allclose(out, ref, rtol=1e-4, atol=1e-4), f"max abs err {err}"
    assert jnp.array_equal(out_nc, x_up)

    print("KERNEL_OK")
</pallas_src>

<mosaic_0001>
module attributes {stable_mosaic.version = 11 : i64} {
  func.func @_upsample_conv_kernel(%arg0: i32, %arg1: memref<1x18x64xf32, #tpu.memory_space<vmem>>, %arg2: memref<3x64x256xf32, #tpu.memory_space<vmem>>, %arg3: memref<1x256xf32, #tpu.memory_space<vmem>>, %arg4: memref<1x16x256xf32, #tpu.memory_space<vmem>>) attributes {dimension_semantics = [#tpu.dimension_semantics<parallel>], iteration_bounds = array<i64: 2>, scalar_prefetch = 0 : i64, scratch_operands = 0 : i64, tpu.core_type = #tpu.core_type<tc>, window_params = [{transform_indices = @transform_0, window_bounds = array<i64: 1, 18, 64>}, {pipeline_mode = #tpu.pipeline_mode<synchronous>, transform_indices = @transform_1, window_bounds = array<i64: 3, 64, 256>}, {pipeline_mode = #tpu.pipeline_mode<synchronous>, transform_indices = @transform_2, window_bounds = array<i64: 1, 256>}, {transform_indices = @transform_3, window_bounds = array<i64: 1, 16, 256>}]} {
    %c0 = arith.constant 0 : index
    %c0_0 = arith.constant 0 : index
    %c0_1 = arith.constant 0 : index
    %0 = vector.load %arg1[%c0, %c0_0, %c0_1] : memref<1x18x64xf32, #tpu.memory_space<vmem>>, vector<1x16x64xf32>
    %1 = vector.shape_cast %0 : vector<1x16x64xf32> to vector<16x64xf32>
    %c0_2 = arith.constant 0 : index
    %c0_3 = arith.constant 0 : index
    %c0_4 = arith.constant 0 : index
    %2 = vector.load %arg2[%c0_2, %c0_3, %c0_4] : memref<3x64x256xf32, #tpu.memory_space<vmem>>, vector<1x64x256xf32>
    %3 = vector.shape_cast %2 : vector<1x64x256xf32> to vector<64x256xf32>
    %cst = arith.constant dense<0.000000e+00> : vector<16x256xf32>
    %4 = tpu.matmul %1, %3, %cst {dimension_numbers = #tpu.dot_dimension_numbers<[1], [0], [0], [1], [0, 0, 1, 1], [], []>} : vector<16x64xf32>, vector<64x256xf32>, vector<16x256xf32> -> vector<16x256xf32>
    %c0_5 = arith.constant 0 : index
    %c1 = arith.constant 1 : index
    %c0_6 = arith.constant 0 : index
    %5 = vector.load %arg1[%c0_5, %c1, %c0_6] : memref<1x18x64xf32, #tpu.memory_space<vmem>>, vector<1x16x64xf32>
    %6 = vector.shape_cast %5 : vector<1x16x64xf32> to vector<16x64xf32>
    %c1_7 = arith.constant 1 : index
    %c0_8 = arith.constant 0 : index
    %c0_9 = arith.constant 0 : index
    %7 = vector.load %arg2[%c1_7, %c0_8, %c0_9] : memref<3x64x256xf32, #tpu.memory_space<vmem>>, vector<1x64x256xf32>
    %8 = vector.shape_cast %7 : vector<1x64x256xf32> to vector<64x256xf32>
    %cst_10 = arith.constant dense<0.000000e+00> : vector<16x256xf32>
    %9 = tpu.matmul %6, %8, %cst_10 {dimension_numbers = #tpu.dot_dimension_numbers<[1], [0], [0], [1], [0, 0, 1, 1], [], []>} : vector<16x64xf32>, vector<64x256xf32>, vector<16x256xf32> -> vector<16x256xf32>
    %10 = arith.addf %4, %9 : vector<16x256xf32>
    %c0_11 = arith.constant 0 : index
    %c2 = arith.constant 2 : index
    %c0_12 = arith.constant 0 : index
    %11 = vector.load %arg1[%c0_11, %c2, %c0_12] : memref<1x18x64xf32, #tpu.memory_space<vmem>>, vector<1x16x64xf32>
    %12 = vector.shape_cast %11 : vector<1x16x64xf32> to vector<16x64xf32>
    %c2_13 = arith.constant 2 : index
    %c0_14 = arith.constant 0 : index
    %c0_15 = arith.constant 0 : index
    %13 = vector.load %arg2[%c2_13, %c0_14, %c0_15] : memref<3x64x256xf32, #tpu.memory_space<vmem>>, vector<1x64x256xf32>
    %14 = vector.shape_cast %13 : vector<1x64x256xf32> to vector<64x256xf32>
    %cst_16 = arith.constant dense<0.000000e+00> : vector<16x256xf32>
    %15 = tpu.matmul %12, %14, %cst_16 {dimension_numbers = #tpu.dot_dimension_numbers<[1], [0], [0], [1], [0, 0, 1, 1], [], []>} : vector<16x64xf32>, vector<64x256xf32>, vector<16x256xf32> -> vector<16x256xf32>
    %16 = arith.addf %10, %15 : vector<16x256xf32>
    %c0_17 = arith.constant 0 : index
    %c0_18 = arith.constant 0 : index
    %17 = vector.load %arg3[%c0_17, %c0_18] : memref<1x256xf32, #tpu.memory_space<vmem>>, vector<1x256xf32>
    %18 = vector.broadcast %17 : vector<1x256xf32> to vector<16x256xf32>
    %19 = arith.addf %16, %18 : vector<16x256xf32>
    %c0_19 = arith.constant 0 : index
    %c0_20 = arith.constant 0 : index
    %c0_21 = arith.constant 0 : index
    %20 = vector.load %arg4[%c0_19, %c0_20, %c0_21] : memref<1x16x256xf32, #tpu.memory_space<vmem>>, vector<1x16x256xf32>
    %21 = vector.shape_cast %20 : vector<1x16x256xf32> to vector<16x256xf32>
    %22 = vector.shape_cast %19 : vector<16x256xf32> to vector<1x16x256xf32>
    tpu.vector_store %arg4[%c0_19, %c0_20, %c0_21], %22 {strides = array<i32>} : memref<1x16x256xf32, #tpu.memory_space<vmem>>, vector<1x16x256xf32>,
    return
  }
  func.func @transform_0(%arg0: i32) -> (i32, i32, i32) {
    %c0_i32 = arith.constant 0 : i32
    %c0_i32_0 = arith.constant 0 : i32
    %c0_i32_1 = arith.constant 0 : i32
    return %arg0, %c0_i32, %c0_i32_0 : i32, i32, i32
  }
  func.func @transform_1(%arg0: i32) -> (i32, i32, i32) {
    %c0_i32 = arith.constant 0 : i32
    %c0_i32_0 = arith.constant 0 : i32
    %c0_i32_1 = arith.constant 0 : i32
    %c0_i32_2 = arith.constant 0 : i32
    return %c0_i32, %c0_i32_0, %c0_i32_1 : i32, i32, i32
  }
  func.func @transform_2(%arg0: i32) -> (i32, i32) {
    %c0_i32 = arith.constant 0 : i32
    %c0_i32_0 = arith.constant 0 : i32
    %c0_i32_1 = arith.constant 0 : i32
    return %c0_i32, %c0_i32_0 : i32, i32
  }
  func.func @transform_3(%arg0: i32) -> (i32, i32, i32) {
    %c0_i32 = arith.constant 0 : i32
    %c0_i32_0 = arith.constant 0 : i32
    %c0_i32_1 = arith.constant 0 : i32
    return %arg0, %c0_i32, %c0_i32_0 : i32, i32, i32
  }
}

</mosaic_0001>

<llo_original>
// kernel: tile.5
$region0: #{tile.5}
  %s0 = inlined_call_operand.vmem [shape: f32[4,32], index: 0, kind: input, shape index: {}]
  %s1 = inlined_call_operand.vmem [shape: f32[128], index: 1, kind: output, shape index: {}]
  $region1: #{tile.5} parent=0
    #allocation0 [shape = 'u8[4096]{0}', space=vmem, size = 0x1000, scoped, tag = 'scoped mem for output reshape']
    #allocation1 [shape = 'u8[4096]{0}', space=vmem, size = 0x1000, scoped, tag = 'scoped mem for input reshape']
    %s3 = ssub.s32 16, 1
    %v4 = vld [vmem:[%s0] sm:%s3]
    %5 = vst [vmem:[#allocation1] sm:%s3] %v4
    %v6 = vld [vmem:[#allocation1] sm:$0x1]
    %vm7 = vcmask 261120
    %8 = vst.msk [vmem:[#allocation0] sm:$0x1] %vm7, %v6
    %s9 = scalar_lea.vmem [#allocation1], 3
    %v10 = vld [vmem:[%s9] sm:$0x1]
    %11 = vrot.lane.b32.xlu0 %v10, 96
    %v12 = vpop.permute.xlu0 %11
    %vm13 = vcmask 1048320
    %14 = vst.msk [vmem:[#allocation0] sm:$0x1] %vm13, %v12
    %s15 = scalar_lea.vmem [#allocation1], 2
    %v16 = vld [vmem:[%s15] sm:$0x1]
    %17 = vrot.lane.b32.xlu0 %v16, 64
    %v18 = vpop.permute.xlu0 %17
    %vm19 = vcmask 785920
    %20 = vst.msk [vmem:[#allocation0] sm:$0x1] %vm19, %v18
    %s21 = scalar_lea.vmem [#allocation1], 1
    %v22 = vld [vmem:[%s21] sm:$0x1]
    %23 = vrot.lane.b32.xlu0 %v22, 32
    %v24 = vpop.permute.xlu0 %23
    %vm25 = vcmask 523520
    %26 = vst.msk [vmem:[#allocation0] sm:$0x1] %vm25, %v24
    %s28 = ssub.s32 2, 1
    %v29 = vld [vmem:[#allocation0] sm:%s28]
    %s31 = ssub.s32 2, 1
    %32 = vst [vmem:[%s1] sm:%s31] %v29

// kernel: tile.6
$region0: #{tile.6}
  #allocation0 [shape = 's32[1]{0}', space=sflag, size = 0x4, scoped, tag = 'scoped memory for tile.6']
  %s0 = inlined_call_operand.vmem [shape: f32[128], index: 0, kind: input, shape index: {}]
  %s1 = inlined_call_operand.vmem [shape: f32[2,128], index: 1, kind: output, shape index: {}]
  // Predicated region
  $region2: #{tile.6} parent=0 // pred_check
    _
  $region3: #{tile.6} parent=0 // pred_check_branch
    %3 = sbr.rel (0) target = $region5
  $region4: #{tile.6} parent=0 // pred_region
    _
  $region5: #{tile.6} parent=0 // pred_fallthru
    _
  %v4 = vld [vmem:[%s0] ss:$0 sm:$0xff]
  %5 = vst [vmem:[%s1] sm:$0x3] %v4

// kernel: upsample_forward.1
$region0: #{upsample_forward.1}
  #allocation0 [shape = 'u32[]', space=smem, size = 0x4, offset = 0x4, fixed_abs, tag = 'smem constant byte address 0x4 - core index']
  #allocation1 [shape = 'u32[72,128]{1,0:T(1,128)}', space=vmem, size = 0x9000, scoped, tag = 'internal scratch']
  %s0 = inlined_call_operand.vmem [shape: f32[2,18,64], index: 0, kind: input, shape index: {}]
  %s1 = inlined_call_operand.vmem [shape: f32[3,64,256], index: 1, kind: input, shape index: {}]
  %s2 = inlined_call_operand.vmem [shape: f32[1,256], index: 2, kind: input, shape index: {}]
  %s3 = inlined_call_operand.vmem [shape: f32[2,16,256], index: 3, kind: output, shape index: {}]
  %s4 = sld [smem:[#allocation0]]
  $region45: #{upsample_forward.1} parent=0
    _
  %s6 = ssub.s32 1, %s4
  %s7 = scalar_select 0, %s6, %s4
  loop: start=0, step=1, limit=4
  $region2: #{upsample_forward.1} parent=0 // loop_pre_header
    _
  $region3: #{upsample_forward.1} parent=0 // loop_header
    %s9 = sphi 0, %s13
    %p10 = scmp.ge.s32.totalorder %s9, 4
    %s19 = sphi 0, %s21
    %s22 = sphi 0, %s19
    %s23 = sphi 0, %s22
    %s39 = sphi 0, %s23
    %s43 = sphi 0, %s43
    %s45 = sphi 0, %s43
    %s46 = sphi 0, %s45
    %s60 = sphi 0, %s46
    %s64 = sphi 0, %s64
    %s66 = sphi 0, %s64
    %s67 = sphi 0, %s66
    %s81 = sphi 0, %s67
    %s87 = sphi 0, %s89
    %s90 = sphi 0, %s87
    %s91 = sphi 0, %s90
    %s107 = sphi 0, %s91
  $region4: #{upsample_forward.1} parent=0 // loop_header_branch
    %12 = sbr.rel (%p10) target = $region8
  $region5: #{upsample_forward.1} parent=0 // loop_body
    %s14 = ssub.s32 %s9, 1
    %s15 = ssub.s32 %s9, 2
    %s16 = sadd.s32 %s9, 1
    %s17 = ssub.s32 %s9, %s16
    %p18 = scmp.eq.s32.totalorder %s17, 0
    %s20 = sadd.s32 %s19, 1
    %s21 = scalar_select %p18, %s19, %s20
    %p24 = pneg %p18
    %p25 = scmp.eq.s32.totalorder %s9, 1
    %p26 = por %p24, %p25
    %p27 = scmp.ne.s32.totalorder %s19, %s22
    %p28 = scmp.eq.s32.totalorder %s9, 0
    %p29 = por %p27, %p28
    %p30 = scmp.ne.s32.totalorder %s19, %s22
    %p31 = scmp.eq.s32.totalorder %s14, 1
    %p32 = por %p30, %p31
    %p33 = scmp.ne.s32.totalorder %s22, %s23
    %p34 = scmp.eq.s32.totalorder %s14, 0
    %p35 = por %p33, %p34
    %p36 = scmp.ne.s32.totalorder %s22, %s23
    %p37 = scmp.eq.s32.totalorder %s15, 1
    %p38 = por %p36, %p37
    %p40 = scmp.ne.s32.totalorder %s23, %s39
    %p41 = scmp.eq.s32.totalorder %s15, 0
    %p42 = por %p40, %p41
    %s44 = sadd.s32 %s43, 1
    %p47 = scmp.eq.s32.totalorder %s9, 1
    %p48 = scmp.ne.s32.totalorder %s43, %s45
    %p49 = scmp.eq.s32.totalorder %s9, 0
    %p50 = por %p48, %p49
    %p51 = scmp.ne.s32.totalorder %s43, %s45
    %p52 = scmp.eq.s32.totalorder %s14, 1
    %p53 = por %p51, %p52
    %p54 = scmp.ne.s32.totalorder %s45, %s46
    %p55 = scmp.eq.s32.totalorder %s14, 0
    %p56 = por %p54, %p55
    %p57 = scmp.ne.s32.totalorder %s45, %s46
    %p58 = scmp.eq.s32.totalorder %s15, 1
    %p59 = por %p57, %p58
    %p61 = scmp.ne.s32.totalorder %s46, %s60
    %p62 = scmp.eq.s32.totalorder %s15, 0
    %p63 = por %p61, %p62
    %s65 = sadd.s32 %s64, 1
    %p68 = scmp.eq.s32.totalorder %s9, 1
    %p69 = scmp.ne.s32.totalorder %s64, %s66
    %p70 = scmp.eq.s32.totalorder %s9, 0
    %p71 = por %p69, %p70
    %p72 = scmp.ne.s32.totalorder %s64, %s66
    %p73 = scmp.eq.s32.totalorder %s14, 1
    %p74 = por %p72, %p73
    %p75 = scmp.ne.s32.totalorder %s66, %s67
    %p76 = scmp.eq.s32.totalorder %s14, 0
    %p77 = por %p75, %p76
    %p78 = scmp.ne.s32.totalorder %s66, %s67
    %p79 = scmp.eq.s32.totalorder %s15, 1
    %p80 = por %p78, %p79
    %p82 = scmp.ne.s32.totalorder %s67, %s81
    %p83 = scmp.eq.s32.totalorder %s15, 0
    %p84 = por %p82, %p83
    %s85 = ssub.s32 %s9, %s16
    %p86 = scmp.eq.s32.totalorder %s85, 0
    %s88 = sadd.s32 %s87, 1
    %s89 = scalar_select %p86, %s87, %s88
    %p92 = pneg %p86
    %p93 = scmp.eq.s32.totalorder %s9, 1
    %p94 = por %p92, %p93
    %p95 = scmp.ne.s32.totalorder %s87, %s90
    %p96 = scmp.eq.s32.totalorder %s9, 0
    %p97 = por %p95, %p96
    %p98 = scmp.ne.s32.totalorder %s87, %s90
    %p99 = scmp.eq.s32.totalorder %s14, 1
    %p100 = por %p98, %p99
    %p101 = scmp.ne.s32.totalorder %s90, %s91
    %p102 = scmp.eq.s32.totalorder %s14, 0
    %p103 = por %p101, %p102
    %p104 = scmp.ne.s32.totalorder %s90, %s91
    %p105 = scmp.eq.s32.totalorder %s15, 1
    %p106 = por %p104, %p105
    %p108 = scmp.ne.s32.totalorder %s91, %s107
    %p109 = scmp.eq.s32.totalorder %s15, 0
    %p110 = por %p108, %p109
    %p111 = scmp.le.s32.totalorder 1, %s9
    %p112 = scmp.lt.s32.totalorder %s9, 3
    %p113 = pnand %p111, %p112
    %p114 = pneg %p113
    // Predicated region
    $region9: #{upsample_forward.1} parent=5 // pred_check
      _
    $region10: #{upsample_forward.1} parent=5 // pred_check_branch
      %116 = sbr.rel (%p113) target = $region12
    $region11: #{upsample_forward.1} parent=5 // pred_region
      %s117 = ssub.s32 %s9, 1
      // Predicated region
      $region13: #{upsample_forward.1} parent=11 // pred_check
        %p118 = pneg %p56
      $region14: #{upsample_forward.1} parent=11 // pred_check_branch
        %120 = sbr.rel (%p118) target = $region16
      $region15: #{upsample_forward.1} parent=11 // pred_region
        _
      $region16: #{upsample_forward.1} parent=11 // pred_fallthru
        _
      // Predicated region
      $region17: #{upsample_forward.1} parent=11 // pred_check
        %p121 = pneg %p77
      $region18: #{upsample_forward.1} parent=11 // pred_check_branch
        %123 = sbr.rel (%p121) target = $region20
      $region19: #{upsample_forward.1} parent=11 // pred_region
        _
      $region20: #{upsample_forward.1} parent=11 // pred_fallthru
        _
    $region12: #{upsample_forward.1} parent=5 // pred_fallthru
      _
    %p124 = scmp.lt.s32.totalorder %s9, 2
    // Predicated region
    $region21: #{upsample_forward.1} parent=5 // pred_check
      %p125 = pneg %p124
    $region22: #{upsample_forward.1} parent=5 // pred_check_branch
      %127 = sbr.rel (%p125) target = $region24
    $region23: #{upsample_forward.1} parent=5 // pred_region
      // Predicated region
      $region25: #{upsample_forward.1} parent=23 // pred_check
        %p128 = pneg %p29
      $region26: #{upsample_forward.1} parent=23 // pred_check_branch
        %130 = sbr.rel (%p128) target = $region28
      $region27: #{upsample_forward.1} parent=23 // pred_region
        %p131 = scmp.lt.s32.totalorder %s9, 1
        %s132 = scalar_select %p131, %s9, 1
        %s133 = smul.addr %s132, 3
        %s134 = smul.addr %s133, 8
        %s135 = scalar_lea.vmem %s0, %s134
      $region28: #{upsample_forward.1} parent=23 // pred_fallthru
        _
    $region24: #{upsample_forward.1} parent=5 // pred_fallthru
      _
    %p136 = scmp.le.s32.totalorder 1, %s9
    %p137 = scmp.lt.s32.totalorder %s9, 3
    %p138 = pnand %p136, %p137
    %p139 = pneg %p138
    // Predicated region
    $region29: #{upsample_forward.1} parent=5 // pred_check
      _
    $region30: #{upsample_forward.1} parent=5 // pred_check_branch
      %141 = sbr.rel (%p138) target = $region32
    $region31: #{upsample_forward.1} parent=5 // pred_region
      %s142 = ssub.s32 %s9, 1
      %p143 = scmp.lt.s32.totalorder %s14, 1
      %s144 = scalar_select %p143, %s14, 1
      %s145 = smul.addr %s144, 3
      %s146 = smul.addr %s145, 8
      %s147 = scalar_lea.vmem %s0, %s146
      %p148 = pneg %p35
      %p149 = pneg %p32
      %p150 = pneg %p56
      %p151 = pneg %p53
      %p152 = pneg %p77
      %p153 = pneg %p74
      %p154 = pneg %p103
      %p155 = pneg %p100
      %p156 = scmp.lt.s32.totalorder %s14, 1
      %s157 = scalar_select %p156, %s14, 1
      %s158 = smul.addr %s157, 4
      %s159 = smul.addr %s158, 8
      %s160 = scalar_lea.vmem %s3, %s159
      %p161 = scmp.lt.s32.totalorder %s14, 1
      %s162 = scalar_select %p161, %s14, 1
      %s163 = smul.addr %s162, 3
      %s164 = smul.addr %s163, 8
      %s165 = scalar_lea.vmem %s0, %s164
      %p166 = scmp.lt.s32.totalorder %s14, 1
      %s167 = scalar_select %p166, %s14, 1
      %s168 = smul.addr %s167, 4
      %s169 = smul.addr %s168, 8
      %s170 = scalar_lea.vmem %s3, %s169
      %v171 = vld [vmem:[%s165] sm:$0xff]
      %v172 = vld [vmem:[%s165 + $0x8] sm:$0xff]
      %v173 = vld [vmem:[%s1] sm:$0xff]
      %v174 = vld [vmem:[%s1 + $0x8] sm:$0xff]
      %v175 = vld [vmem:[%s1 + $0x10] sm:$0xff]
      %v176 = vld [vmem:[%s1 + $0x18] sm:$0xff]
      %v177 = vld [vmem:[%s1 + $0x20] sm:$0xff]
      %v178 = vld [vmem:[%s1 + $0x28] sm:$0xff]
      %v179 = vld [vmem:[%s1 + $0x30] sm:$0xff]
      %v180 = vld [vmem:[%s1 + $0x38] sm:$0xff]
      %v181 = vld [vmem:[%s1 + $0x40] sm:$0xff]
      %v182 = vld [vmem:[%s1 + $0x48] sm:$0xff]
      %v183 = vld [vmem:[%s1 + $0x50] sm:$0xff]
      %v184 = vld [vmem:[%s1 + $0x58] sm:$0xff]
      %v185 = vld [vmem:[%s1 + $0x60] sm:$0xff]
      %v186 = vld [vmem:[%s1 + $0x68] sm:$0xff]
      %v187 = vld [vmem:[%s1 + $0x70] sm:$0xff]
      %v188 = vld [vmem:[%s1 + $0x78] sm:$0xff]
      %v189 = vld [vmem:[%s165 + $0x1] sm:$0xff]
      %v190 = vld [vmem:[%s165 + $0x9] sm:$0xff]
      %s191 = scalar_lea.vmem %s1, 128
      %v192 = vld [vmem:[%s191] sm:$0xff]
      %v193 = vld [vmem:[%s191 + $0x8] sm:$0xff]
      %v194 = vld [vmem:[%s191 + $0x10] sm:$0xff]
      %v195 = vld [vmem:[%s191 + $0x18] sm:$0xff]
      %v196 = vld [vmem:[%s191 + $0x20] sm:$0xff]
      %v197 = vld [vmem:[%s191 + $0x28] sm:$0xff]
      %v198 = vld [vmem:[%s191 + $0x30] sm:$0xff]
      %v199 = vld [vmem:[%s191 + $0x38] sm:$0xff]
      %v200 = vld [vmem:[%s191 + $0x40] sm:$0xff]
      %v201 = vld [vmem:[%s191 + $0x48] sm:$0xff]
      %v202 = vld [vmem:[%s191 + $0x50] sm:$0xff]
      %v203 = vld [vmem:[%s191 + $0x58] sm:$0xff]
      %v204 = vld [vmem:[%s191 + $0x60] sm:$0xff]
      %v205 = vld [vmem:[%s191 + $0x68] sm:$0xff]
      %v206 = vld [vmem:[%s191 + $0x70] sm:$0xff]
      %v207 = vld [vmem:[%s191 + $0x78] sm:$0xff]
      %vm208 = vcmask 523264
      %v210 = vsel %vm208, %v189, 0
      %v213 = vsel %vm208, %v190, 0
      %215 = vmatpush.msra.mxu0 0.0
      %216 = vmatpush.msra.mxu0 0.0
      %217 = vmatpush.msra.mxu0 0.0
      %218 = vmatpush.msra.mxu0 0.0
      %219 = vmatpush.msra.mxu0 0.0
      %220 = vmatpush.msra.mxu0 0.0
      %221 = vmatpush.msra.mxu0 0.0
      %222 = vmatpush.msra.mxu0 0.0
      %223 = vmatpush.msra.mxu0 %v206
      %224 = vmatpush.msra.mxu0 %v204
      %225 = vmatpush.msra.mxu0 %v202
      %226 = vmatpush.msra.mxu0 %v200
      %227 = vmatpush.msra.mxu0 %v198
      %228 = vmatpush.msra.mxu0 %v196
      %229 = vmatpush.msra.mxu0 %v194
      %230 = vmatpush.msra.mxu0 %v192
      %231 = vmatmul.f32.gmra.mxu0 %v210
      %v232 = vpop.f32.mrf.mxu0
      %v233 = vadd.f32 0.0, %v232
      %234 = vmatmul.f32.gmra.mxu0 %v213
      %v235 = vpop.f32.mrf.mxu0
      %v236 = vadd.f32 0.0, %v235
      %237 = vdwg.mxu0
      %238 = vmatpush.msra.mxu0 0.0
      %239 = vmatpush.msra.mxu0 0.0
      %240 = vmatpush.msra.mxu0 0.0
      %241 = vmatpush.msra.mxu0 0.0
      %242 = vmatpush.msra.mxu0 0.0
      %243 = vmatpush.msra.mxu0 0.0
      %244 = vmatpush.msra.mxu0 0.0
      %245 = vmatpush.msra.mxu0 0.0
      %246 = vmatpush.msra.mxu0 %v207
      %247 = vmatpush.msra.mxu0 %v205
      %248 = vmatpush.msra.mxu0 %v203
      %249 = vmatpush.msra.mxu0 %v201
      %250 = vmatpush.msra.mxu0 %v199
      %251 = vmatpush.msra.mxu0 %v197
      %252 = vmatpush.msra.mxu0 %v195
      %253 = vmatpush.msra.mxu0 %v193
      %254 = vmatmul.f32.gmra.mxu0 %v210
      %v255 = vpop.f32.mrf.mxu0
      %v256 = vadd.f32 0.0, %v255
      %257 = vmatmul.f32.gmra.mxu0 %v213
      %v258 = vpop.f32.mrf.mxu0
      %v259 = vadd.f32 0.0, %v258
      %260 = vdwg.mxu0
      %v262 = vsel %vm208, %v171, 0
      %v265 = vsel %vm208, %v172, 0
      %267 = vmatpush.msra.mxu0 0.0
      %268 = vmatpush.msra.mxu0 0.0
      %269 = vmatpush.msra.mxu0 0.0
      %270 = vmatpush.msra.mxu0 0.0
      %271 = vmatpush.msra.mxu0 0.0
      %272 = vmatpush.msra.mxu0 0.0
      %273 = vmatpush.msra.mxu0 0.0
      %274 = vmatpush.msra.mxu0 0.0
      %275 = vmatpush.msra.mxu0 %v187
      %276 = vmatpush.msra.mxu0 %v185
      %277 = vmatpush.msra.mxu0 %v183
      %278 = vmatpush.msra.mxu0 %v181
      %279 = vmatpush.msra.mxu0 %v179
      %280 = vmatpush.msra.mxu0 %v177
      %281 = vmatpush.msra.mxu0 %v175
      %282 = vmatpush.msra.mxu0 %v173
      %283 = vmatmul.f32.gmra.mxu0 %v262
      %v284 = vpop.f32.mrf.mxu0
      %v285 = vadd.f32 %v233, %v284
      %286 = vmatmul.f32.gmra.mxu0 %v265
      %v287 = vpop.f32.mrf.mxu0
      %v288 = vadd.f32 %v236, %v287
      %289 = vdwg.mxu0
      %290 = vmatpush.msra.mxu0 0.0
      %291 = vmatpush.msra.mxu0 0.0
      %292 = vmatpush.msra.mxu0 0.0
      %293 = vmatpush.msra.mxu0 0.0
      %294 = vmatpush.msra.mxu0 0.0
      %295 = vmatpush.msra.mxu0 0.0
      %296 = vmatpush.msra.mxu0 0.0
      %297 = vmatpush.msra.mxu0 0.0
      %298 = vmatpush.msra.mxu0 %v188
      %299 = vmatpush.msra.mxu0 %v186
      %300 = vmatpush.msra.mxu0 %v184
      %301 = vmatpush.msra.mxu0 %v182
      %302 = vmatpush.msra.mxu0 %v180
      %303 = vmatpush.msra.mxu0 %v178
      %304 = vmatpush.msra.mxu0 %v176
      %305 = vmatpush.msra.mxu0 %v174
      %306 = vmatmul.f32.gmra.mxu0 %v262
      %v307 = vpop.f32.mrf.mxu0
      %v308 = vadd.f32 %v256, %v307
      %309 = vmatmul.f32.gmra.mxu0 %v265
      %v310 = vpop.f32.mrf.mxu0
      %v311 = vadd.f32 %v259, %v310
      %312 = vdwg.mxu0
      %v313 = vld [vmem:[%s165 + $0x2] sm:$0xff]
      %v314 = vld [vmem:[%s165 + $0xa] sm:$0xff]
      %s315 = scalar_lea.vmem %s1, 256
      %v316 = vld [vmem:[%s315] sm:$0xff]
      %v317 = vld [vmem:[%s315 + $0x8] sm:$0xff]
      %v318 = vld [vmem:[%s315 + $0x10] sm:$0xff]
      %v319 = vld [vmem:[%s315 + $0x18] sm:$0xff]
      %v320 = vld [vmem:[%s315 + $0x20] sm:$0xff]
      %v321 = vld [vmem:[%s315 + $0x28] sm:$0xff]
      %v322 = vld [vmem:[%s315 + $0x30] sm:$0xff]
      %v323 = vld [vmem:[%s315 + $0x38] sm:$0xff]
      %v324 = vld [vmem:[%s315 + $0x40] sm:$0xff]
      %v325 = vld [vmem:[%s315 + $0x48] sm:$0xff]
      %v326 = vld [vmem:[%s315 + $0x50] sm:$0xff]
      %v327 = vld [vmem:[%s315 + $0x58] sm:$0xff]
      %v328 = vld [vmem:[%s315 + $0x60] sm:$0xff]
      %v329 = vld [vmem:[%s315 + $0x68] sm:$0xff]
      %v330 = vld [vmem:[%s315 + $0x70] sm:$0xff]
      %v331 = vld [vmem:[%s315 + $0x78] sm:$0xff]
      %v333 = vsel %vm208, %v313, 0
      %v336 = vsel %vm208, %v314, 0
      %338 = vmatpush.msra.mxu0 0.0
      %339 = vmatpush.msra.mxu0 0.0
      %340 = vmatpush.msra.mxu0 0.0
      %341 = vmatpush.msra.mxu0 0.0
      %342 = vmatpush.msra.mxu0 0.0
      %343 = vmatpush.msra.mxu0 0.0
      %344 = vmatpush.msra.mxu0 0.0
      %345 = vmatpush.msra.mxu0 0.0
      %346 = vmatpush.msra.mxu0 %v330
      %347 = vmatpush.msra.mxu0 %v328
      %348 = vmatpush.msra.mxu0 %v326
      %349 = vmatpush.msra.mxu0 %v324
      %350 = vmatpush.msra.mxu0 %v322
      %351 = vmatpush.msra.mxu0 %v320
      %352 = vmatpush.msra.mxu0 %v318
      %353 = vmatpush.msra.mxu0 %v316
      %354 = vmatmul.f32.gmra.mxu0 %v333
      %v355 = vpop.f32.mrf.mxu0
      %v356 = vadd.f32 0.0, %v355
      %357 = vmatmul.f32.gmra.mxu0 %v336
      %v358 = vpop.f32.mrf.mxu0
      %v359 = vadd.f32 0.0, %v358
      %360 = vdwg.mxu0
      %361 = vmatpush.msra.mxu0 0.0
      %362 = vmatpush.msra.mxu0 0.0
      %363 = vmatpush.msra.mxu0 0.0
      %364 = vmatpush.msra.mxu0 0.0
      %365 = vmatpush.msra.mxu0 0.0
      %366 = vmatpush.msra.mxu0 0.0
      %367 = vmatpush.msra.mxu0 0.0
      %368 = vmatpush.msra.mxu0 0.0
      %369 = vmatpush.msra.mxu0 %v331
      %370 = vmatpush.msra.mxu0 %v329
      %371 = vmatpush.msra.mxu0 %v327
      %372 = vmatpush.msra.mxu0 %v325
      %373 = vmatpush.msra.mxu0 %v323
      %374 = vmatpush.msra.mxu0 %v321
      %375 = vmatpush.msra.mxu0 %v319
      %376 = vmatpush.msra.mxu0 %v317
      %377 = vmatmul.f32.gmra.mxu0 %v333
      %v378 = vpop.f32.mrf.mxu0
      %v379 = vadd.f32 0.0, %v378
      %380 = vmatmul.f32.gmra.mxu0 %v336
      %v381 = vpop.f32.mrf.mxu0
      %v382 = vadd.f32 0.0, %v381
      %383 = vdwg.mxu0
      %v384 = vadd.f32 %v285, %v356
      %v385 = vadd.f32 %v308, %v379
      %v386 = vadd.f32 %v288, %v359
      %v387 = vadd.f32 %v311, %v382
      %v388 = vld [vmem:[%s2] sm:$0x3]
      %v390 = vperm.slane %v388, 0
      %v391 = vperm.slane %v388, 1
      %v394 = vadd.f32 %v384, %v390
      %v395 = vadd.f32 %v385, %v391
      %v396 = vadd.f32 %v386, %v390
      %v397 = vadd.f32 %v387, %v391
      %398 = vst [vmem:[%s170] sm:$0xff] %v394
      %399 = vst [vmem:[%s170 + $0x8] sm:$0xff] %v395
      %400 = vst [vmem:[%s170 + $0x10] sm:$0xff] %v396
      %401 = vst [vmem:[%s170 + $0x18] sm:$0xff] %v397
      %p402 = scmp.lt.s32.totalorder %s14, 1
      %s403 = scalar_select %p402, %s14, 1
      %s404 = smul.addr %s403, 4
      %s405 = smul.addr %s404, 8
      %s406 = scalar_lea.vmem %s3, %s405
      // Predicated region
      $region33: #{upsample_forward.1} parent=31 // pred_check
        %p407 = pneg %p100
      $region34: #{upsample_forward.1} parent=31 // pred_check_branch
        %409 = sbr.rel (%p407) target = $region36
      $region35: #{upsample_forward.1} parent=31 // pred_region
        _
      $region36: #{upsample_forward.1} parent=31 // pred_fallthru
        _
    $region32: #{upsample_forward.1} parent=5 // pred_fallthru
      _
    %p410 = scmp.le.s32.totalorder 2, %s9
    // Predicated region
    $region37: #{upsample_forward.1} parent=5 // pred_check
      %p411 = pneg %p410
    $region38: #{upsample_forward.1} parent=5 // pred_check_branch
      %413 = sbr.rel (%p411) target = $region40
    $region39: #{upsample_forward.1} parent=5 // pred_region
      %s414 = ssub.s32 %s9, 2
      // Predicated region
      $region41: #{upsample_forward.1} parent=39 // pred_check
        %p415 = pneg %p106
      $region42: #{upsample_forward.1} parent=39 // pred_check_branch
        %417 = sbr.rel (%p415) target = $region44
      $region43: #{upsample_forward.1} parent=39 // pred_region
        %p418 = scmp.lt.s32.totalorder %s15, 1
        %s419 = scalar_select %p418, %s15, 1
        %s420 = smul.addr %s419, 4
        %s421 = smul.addr %s420, 8
        %s422 = scalar_lea.vmem %s3, %s421
      $region44: #{upsample_forward.1} parent=39 // pred_fallthru
        _
    $region40: #{upsample_forward.1} parent=5 // pred_fallthru
      _
  $region6: #{upsample_forward.1} parent=0 // loop_footer
    %s13 = sadd.s32 1, %s9
  $region7: #{upsample_forward.1} parent=0 // loop_footer_branch
    %8 = sbr.rel target = $region3
  $region8: #{upsample_forward.1} parent=0 // loop_exit
    _

</llo_original>
